<compile_context>
chip_gen: v5e
topology: v5e:2x2
jax: 0.10.0
libtpu: 0.0.40
codegen_flags: <defaults>
</compile_context>

<pallas_src>
import functools

import jax
import jax.numpy as jnp
from jax.experimental import pallas as pl
from jax.experimental.pallas import tpu as pltpu


def _routing_capsule_kernel(x_ref, w_ref, o_ref, *, n_primary, n_capsules,
                            capsule_length, iterations):
    NP, NC, CL = n_primary, n_capsules, capsule_length

    x = x_ref[...]                                    # (Bb, NP, D), D on lanes
    B, _, D = x.shape

    # --- squash primary capsules along NP (fused coefficient) ----------------
    # (ss/(1+ss)) * x / sqrt(ss)  ==  x * sqrt(ss) / (1 + ss)
    # (For an all-zero primary row this yields 0 where the reference yields
    #  NaN -- a benign divergence for degenerate inputs.)
    ss = jnp.sum(x * x, axis=1, keepdims=True)        # (Bb, 1, D)
    xs = x * (jnp.sqrt(ss) * pl.reciprocal(1.0 + ss, approx=True))

    # --- u[b, nc, cl, d] = sum_n xs[b, n, d] * W[n, nc, cl, d] ----------------
    # NP is small & static -> unrolled VPU multiply-accumulate (no MXU,
    # no relayouts); u is built directly in the (B, NC, CL, D) routing layout.
    u = xs[:, 0, :][:, None, None, :] * w_ref[0][None]
    for n in range(1, NP):
        u = u + xs[:, n, :][:, None, None, :] * w_ref[n][None]
    # u: (Bb, NC, CL, D) float32

    # --- dynamic routing (fully on VPU/XLU/EUP; no MXU ops) -------------------
    bias = jnp.zeros((B, NC, D), jnp.float32)
    for it in range(iterations):
        if it == 0:
            # softmax of an all-zero bias is exactly uniform -> fold 1/NC in.
            s = jnp.sum(u, axis=-1) * (1.0 / NC)                    # (Bb, NC, CL)
        else:
            bmax = jnp.max(bias, axis=1, keepdims=True)             # (Bb, 1, D)
            e = jnp.exp(bias - bmax)
            c = e * pl.reciprocal(jnp.sum(e, axis=1, keepdims=True),
                                  approx=True)                      # (Bb, NC, D)
            # block-diagonal contraction: multiply + lane (D) reduce
            s = jnp.sum(u * c[:, :, None, :], axis=-1)              # (Bb, NC, CL)

        # per-capsule squash factor (fused form):  sqrt(ss2) / (1 + ss2)
        ss2 = jnp.sum(s * s, axis=-1, keepdims=True)                # (Bb, NC, 1)
        factor = jnp.sqrt(ss2) * pl.reciprocal(1.0 + ss2, approx=True)

        if it < iterations - 1:
            # bias[b,nc,d] += factor[b,nc] * sum_cl u[b,nc,cl,d] * s[b,nc,cl]
            t = jnp.sum(u * s[:, :, :, None], axis=2)               # (Bb, NC, D)
            bias = bias + factor * t
        else:
            # v only materialized on the final iteration
            o_ref[...] = (factor * s).astype(o_ref.dtype)           # (Bb, NC, CL)


def routing_capsule(x, weight_t4, n_capsules, capsule_length, iterations=3,
                    block_b=8):
    """Forward pass.

    x:         (B, primary_capsule_length, H, W, n_primary) float32
    weight_t4: (n_primary, n_capsules, capsule_length, D) float32 -- the
               module's (D, n_primary, K) parameter, pre-transposed/reshaped
               once at init time.
    returns:   (B, n_capsules, capsule_length)
    """
    B, P, H, W, NP = x.shape
    D = P * H * W
    NC, CL = n_capsules, capsule_length
    assert weight_t4.shape == (NP, NC, CL, D)

    # lane-dense activation layout: (B, NP, D) with D on the lane axis
    x_bnd = jnp.swapaxes(x.reshape(B, D, NP), 1, 2)

    Bb = min(B, block_b)                     # batch block (grid over batch)
    grid = (pl.cdiv(B, Bb),)

    kernel = functools.partial(
        _routing_capsule_kernel,
        n_primary=NP, n_capsules=NC, capsule_length=CL, iterations=iterations)

    out = pl.pallas_call(
        kernel,
        out_shape=jax.ShapeDtypeStruct((B, NC, CL), x.dtype),
        grid_spec=pltpu.PrefetchScalarGridSpec(
            num_scalar_prefetch=0,
            grid=grid,
            in_specs=[
                pl.BlockSpec((Bb, NP, D), lambda i: (i, 0, 0)),
                # weight block index is grid-invariant -> resident in VMEM
                pl.BlockSpec((NP, NC, CL, D), lambda i: (0, 0, 0, 0)),
            ],
            out_specs=pl.BlockSpec((Bb, NC, CL), lambda i: (i, 0, 0)),
        ),
        compiler_params=pltpu.CompilerParams(
            dimension_semantics=("parallel",)),   # megacore split on v7x
    )(x_bnd, weight_t4)
    return out


def routing_capsule_ref(x, weight, n_capsules, capsule_length, iterations=3):
    """Pure-JAX mirror of the PyTorch forward (weight in original (D, NP, K))."""
    B, P, H, W, NP = x.shape
    D = P * H * W
    t = x.reshape(B, D, NP)
    ss = jnp.sum(t * t, axis=2, keepdims=True)
    t = (ss / (1.0 + ss)) * t / jnp.sqrt(ss)
    u = jnp.einsum('bdn,dnk->bdk', t, weight)
    u = u.reshape(B, D, n_capsules, capsule_length)
    bias = jnp.zeros((B, D, n_capsules), x.dtype)
    v = None
    for i in range(iterations):
        c = jax.nn.softmax(bias, axis=2)
        s = jnp.sum(c[..., None] * u, axis=1)
        ss2 = jnp.sum(s * s, axis=2, keepdims=True)
        v = (ss2 / (1.0 + ss2)) * s / jnp.sqrt(ss2)
        if i < iterations - 1:
            bias = bias + jnp.sum(u * v[:, None, :, :], axis=3)
    return v


if __name__ == "__main__":
    key = jax.random.PRNGKey(0)
    kx, kw = jax.random.split(key)

    # small, module-consistent shapes: tensor_size = (None, 4, 4, 4, 8)
    B, P, H, W, NP = 2, 4, 4, 4, 8
    NC, CL, ITERS = 4, 16, 3
    D, K = P * H * W, NC * CL

    x = jax.random.normal(kx, (B, P, H, W, NP), dtype=jnp.float32)
    # nn.Parameter(torch.randn(...).normal_(0.0, 0.1)) -> N(0, 0.1), deterministic here
    weight = 0.1 * jax.random.normal(kw, (D, NP, K), dtype=jnp.float32)
    # init-time (outside the forward hot path): pre-transpose/reshape to the
    # kernel layout (NP, NC, CL, D)
    weight_t4 = jnp.transpose(weight, (1, 2, 0)).reshape(NP, NC, CL, D)

    out = routing_capsule(x, weight_t4, NC, CL, ITERS)
    out = jax.block_until_ready(out)

    ref = routing_capsule_ref(x, weight, NC, CL, ITERS)
    assert out.shape == (B, NC, CL), out.shape
    # 2e-3 tolerance: the EUP approx reciprocals introduce ~1e-4-level error
    # vs. the full-precision pure-JAX reference.
    max_err = float(jnp.max(jnp.abs(out - ref)))
    assert max_err < 2e-3, f"max abs err {max_err}"

    print("KERNEL_OK")
</pallas_src>

<mosaic_0001>
module attributes {stable_mosaic.version = 11 : i64} {
  func.func @_routing_capsule_kernel(%arg0: i32, %arg1: memref<2x8x64xf32, #tpu.memory_space<vmem>>, %arg2: memref<8x4x16x64xf32, #tpu.memory_space<vmem>>, %arg3: memref<2x4x16xf32, #tpu.memory_space<vmem>>) attributes {dimension_semantics = [#tpu.dimension_semantics<parallel>], iteration_bounds = array<i64: 1>, scalar_prefetch = 0 : i64, scratch_operands = 0 : i64, tpu.core_type = #tpu.core_type<tc>, window_params = [{transform_indices = @transform_0, window_bounds = array<i64: 2, 8, 64>}, {pipeline_mode = #tpu.pipeline_mode<synchronous>, transform_indices = @transform_1, window_bounds = array<i64: 8, 4, 16, 64>}, {transform_indices = @transform_2, window_bounds = array<i64: 2, 4, 16>}]} {
    %c0 = arith.constant 0 : index
    %c0_0 = arith.constant 0 : index
    %c0_1 = arith.constant 0 : index
    %0 = vector.load %arg1[%c0, %c0_0, %c0_1] : memref<2x8x64xf32, #tpu.memory_space<vmem>>, vector<2x8x64xf32>
    %1 = arith.mulf %0, %0 : vector<2x8x64xf32>
    %cst = arith.constant dense<0.000000e+00> : vector<2x64xf32>
    %2 = vector.multi_reduction <add>, %1, %cst [1] : vector<2x8x64xf32> to vector<2x64xf32>
    %3 = vector.shape_cast %2 : vector<2x64xf32> to vector<2x1x64xf32>
    %4 = math.sqrt %3 : vector<2x1x64xf32>
    %cst_2 = arith.constant 1.000000e+00 : f32
    %5 = vector.broadcast %cst_2 : f32 to vector<2x1x64xf32>
    %6 = arith.addf %5, %3 : vector<2x1x64xf32>
    %7 = tpu.reciprocal %6 {approx = true} : vector<2x1x64xf32> -> vector<2x1x64xf32>
    %8 = arith.mulf %4, %7 : vector<2x1x64xf32>
    %9 = vector.broadcast %8 : vector<2x1x64xf32> to vector<2x8x64xf32>
    %10 = arith.mulf %0, %9 : vector<2x8x64xf32>
    %11 = vector.extract_strided_slice %10 {offsets = [0, 0, 0], sizes = [2, 1, 64], strides = [1, 1, 1]} : vector<2x8x64xf32> to vector<2x1x64xf32>
    %12 = vector.shape_cast %11 : vector<2x1x64xf32> to vector<2x64xf32>
    %13 = vector.shape_cast %12 : vector<2x64xf32> to vector<2x1x1x64xf32>
    %c0_3 = arith.constant 0 : index
    %c0_4 = arith.constant 0 : index
    %c0_5 = arith.constant 0 : index
    %c0_6 = arith.constant 0 : index
    %14 = vector.load %arg2[%c0_3, %c0_4, %c0_5, %c0_6] : memref<8x4x16x64xf32, #tpu.memory_space<vmem>>, vector<1x4x16x64xf32>
    %15 = vector.shape_cast %14 : vector<1x4x16x64xf32> to vector<4x16x64xf32>
    %16 = vector.shape_cast %15 : vector<4x16x64xf32> to vector<1x4x16x64xf32>
    %17 = vector.broadcast %13 : vector<2x1x1x64xf32> to vector<2x4x16x64xf32>
    %18 = vector.broadcast %16 : vector<1x4x16x64xf32> to vector<2x4x16x64xf32>
    %19 = arith.mulf %17, %18 : vector<2x4x16x64xf32>
    %20 = vector.extract_strided_slice %10 {offsets = [0, 1, 0], sizes = [2, 1, 64], strides = [1, 1, 1]} : vector<2x8x64xf32> to vector<2x1x64xf32>
    %21 = vector.shape_cast %20 : vector<2x1x64xf32> to vector<2x64xf32>
    %22 = vector.shape_cast %21 : vector<2x64xf32> to vector<2x1x1x64xf32>
    %c1 = arith.constant 1 : index
    %c0_7 = arith.constant 0 : index
    %c0_8 = arith.constant 0 : index
    %c0_9 = arith.constant 0 : index
    %23 = vector.load %arg2[%c1, %c0_7, %c0_8, %c0_9] : memref<8x4x16x64xf32, #tpu.memory_space<vmem>>, vector<1x4x16x64xf32>
    %24 = vector.shape_cast %23 : vector<1x4x16x64xf32> to vector<4x16x64xf32>
    %25 = vector.shape_cast %24 : vector<4x16x64xf32> to vector<1x4x16x64xf32>
    %26 = vector.broadcast %22 : vector<2x1x1x64xf32> to vector<2x4x16x64xf32>
    %27 = vector.broadcast %25 : vector<1x4x16x64xf32> to vector<2x4x16x64xf32>
    %28 = arith.mulf %26, %27 : vector<2x4x16x64xf32>
    %29 = arith.addf %19, %28 : vector<2x4x16x64xf32>
    %30 = vector.extract_strided_slice %10 {offsets = [0, 2, 0], sizes = [2, 1, 64], strides = [1, 1, 1]} : vector<2x8x64xf32> to vector<2x1x64xf32>
    %31 = vector.shape_cast %30 : vector<2x1x64xf32> to vector<2x64xf32>
    %32 = vector.shape_cast %31 : vector<2x64xf32> to vector<2x1x1x64xf32>
    %c2 = arith.constant 2 : index
    %c0_10 = arith.constant 0 : index
    %c0_11 = arith.constant 0 : index
    %c0_12 = arith.constant 0 : index
    %33 = vector.load %arg2[%c2, %c0_10, %c0_11, %c0_12] : memref<8x4x16x64xf32, #tpu.memory_space<vmem>>, vector<1x4x16x64xf32>
    %34 = vector.shape_cast %33 : vector<1x4x16x64xf32> to vector<4x16x64xf32>
    %35 = vector.shape_cast %34 : vector<4x16x64xf32> to vector<1x4x16x64xf32>
    %36 = vector.broadcast %32 : vector<2x1x1x64xf32> to vector<2x4x16x64xf32>
    %37 = vector.broadcast %35 : vector<1x4x16x64xf32> to vector<2x4x16x64xf32>
    %38 = arith.mulf %36, %37 : vector<2x4x16x64xf32>
    %39 = arith.addf %29, %38 : vector<2x4x16x64xf32>
    %40 = vector.extract_strided_slice %10 {offsets = [0, 3, 0], sizes = [2, 1, 64], strides = [1, 1, 1]} : vector<2x8x64xf32> to vector<2x1x64xf32>
    %41 = vector.shape_cast %40 : vector<2x1x64xf32> to vector<2x64xf32>
    %42 = vector.shape_cast %41 : vector<2x64xf32> to vector<2x1x1x64xf32>
    %c3 = arith.constant 3 : index
    %c0_13 = arith.constant 0 : index
    %c0_14 = arith.constant 0 : index
    %c0_15 = arith.constant 0 : index
    %43 = vector.load %arg2[%c3, %c0_13, %c0_14, %c0_15] : memref<8x4x16x64xf32, #tpu.memory_space<vmem>>, vector<1x4x16x64xf32>
    %44 = vector.shape_cast %43 : vector<1x4x16x64xf32> to vector<4x16x64xf32>
    %45 = vector.shape_cast %44 : vector<4x16x64xf32> to vector<1x4x16x64xf32>
    %46 = vector.broadcast %42 : vector<2x1x1x64xf32> to vector<2x4x16x64xf32>
    %47 = vector.broadcast %45 : vector<1x4x16x64xf32> to vector<2x4x16x64xf32>
    %48 = arith.mulf %46, %47 : vector<2x4x16x64xf32>
    %49 = arith.addf %39, %48 : vector<2x4x16x64xf32>
    %50 = vector.extract_strided_slice %10 {offsets = [0, 4, 0], sizes = [2, 1, 64], strides = [1, 1, 1]} : vector<2x8x64xf32> to vector<2x1x64xf32>
    %51 = vector.shape_cast %50 : vector<2x1x64xf32> to vector<2x64xf32>
    %52 = vector.shape_cast %51 : vector<2x64xf32> to vector<2x1x1x64xf32>
    %c4 = arith.constant 4 : index
    %c0_16 = arith.constant 0 : index
    %c0_17 = arith.constant 0 : index
    %c0_18 = arith.constant 0 : index
    %53 = vector.load %arg2[%c4, %c0_16, %c0_17, %c0_18] : memref<8x4x16x64xf32, #tpu.memory_space<vmem>>, vector<1x4x16x64xf32>
    %54 = vector.shape_cast %53 : vector<1x4x16x64xf32> to vector<4x16x64xf32>
    %55 = vector.shape_cast %54 : vector<4x16x64xf32> to vector<1x4x16x64xf32>
    %56 = vector.broadcast %52 : vector<2x1x1x64xf32> to vector<2x4x16x64xf32>
    %57 = vector.broadcast %55 : vector<1x4x16x64xf32> to vector<2x4x16x64xf32>
    %58 = arith.mulf %56, %57 : vector<2x4x16x64xf32>
    %59 = arith.addf %49, %58 : vector<2x4x16x64xf32>
    %60 = vector.extract_strided_slice %10 {offsets = [0, 5, 0], sizes = [2, 1, 64], strides = [1, 1, 1]} : vector<2x8x64xf32> to vector<2x1x64xf32>
    %61 = vector.shape_cast %60 : vector<2x1x64xf32> to vector<2x64xf32>
    %62 = vector.shape_cast %61 : vector<2x64xf32> to vector<2x1x1x64xf32>
    %c5 = arith.constant 5 : index
    %c0_19 = arith.constant 0 : index
    %c0_20 = arith.constant 0 : index
    %c0_21 = arith.constant 0 : index
    %63 = vector.load %arg2[%c5, %c0_19, %c0_20, %c0_21] : memref<8x4x16x64xf32, #tpu.memory_space<vmem>>, vector<1x4x16x64xf32>
    %64 = vector.shape_cast %63 : vector<1x4x16x64xf32> to vector<4x16x64xf32>
    %65 = vector.shape_cast %64 : vector<4x16x64xf32> to vector<1x4x16x64xf32>
    %66 = vector.broadcast %62 : vector<2x1x1x64xf32> to vector<2x4x16x64xf32>
    %67 = vector.broadcast %65 : vector<1x4x16x64xf32> to vector<2x4x16x64xf32>
    %68 = arith.mulf %66, %67 : vector<2x4x16x64xf32>
    %69 = arith.addf %59, %68 : vector<2x4x16x64xf32>
    %70 = vector.extract_strided_slice %10 {offsets = [0, 6, 0], sizes = [2, 1, 64], strides = [1, 1, 1]} : vector<2x8x64xf32> to vector<2x1x64xf32>
    %71 = vector.shape_cast %70 : vector<2x1x64xf32> to vector<2x64xf32>
    %72 = vector.shape_cast %71 : vector<2x64xf32> to vector<2x1x1x64xf32>
    %c6 = arith.constant 6 : index
    %c0_22 = arith.constant 0 : index
    %c0_23 = arith.constant 0 : index
    %c0_24 = arith.constant 0 : index
    %73 = vector.load %arg2[%c6, %c0_22, %c0_23, %c0_24] : memref<8x4x16x64xf32, #tpu.memory_space<vmem>>, vector<1x4x16x64xf32>
    %74 = vector.shape_cast %73 : vector<1x4x16x64xf32> to vector<4x16x64xf32>
    %75 = vector.shape_cast %74 : vector<4x16x64xf32> to vector<1x4x16x64xf32>
    %76 = vector.broadcast %72 : vector<2x1x1x64xf32> to vector<2x4x16x64xf32>
    %77 = vector.broadcast %75 : vector<1x4x16x64xf32> to vector<2x4x16x64xf32>
    %78 = arith.mulf %76, %77 : vector<2x4x16x64xf32>
    %79 = arith.addf %69, %78 : vector<2x4x16x64xf32>
    %80 = vector.extract_strided_slice %10 {offsets = [0, 7, 0], sizes = [2, 1, 64], strides = [1, 1, 1]} : vector<2x8x64xf32> to vector<2x1x64xf32>
    %81 = vector.shape_cast %80 : vector<2x1x64xf32> to vector<2x64xf32>
    %82 = vector.shape_cast %81 : vector<2x64xf32> to vector<2x1x1x64xf32>
    %c7 = arith.constant 7 : index
    %c0_25 = arith.constant 0 : index
    %c0_26 = arith.constant 0 : index
    %c0_27 = arith.constant 0 : index
    %83 = vector.load %arg2[%c7, %c0_25, %c0_26, %c0_27] : memref<8x4x16x64xf32, #tpu.memory_space<vmem>>, vector<1x4x16x64xf32>
    %84 = vector.shape_cast %83 : vector<1x4x16x64xf32> to vector<4x16x64xf32>
    %85 = vector.shape_cast %84 : vector<4x16x64xf32> to vector<1x4x16x64xf32>
    %86 = vector.broadcast %82 : vector<2x1x1x64xf32> to vector<2x4x16x64xf32>
    %87 = vector.broadcast %85 : vector<1x4x16x64xf32> to vector<2x4x16x64xf32>
    %88 = arith.mulf %86, %87 : vector<2x4x16x64xf32>
    %89 = arith.addf %79, %88 : vector<2x4x16x64xf32>
    %cst_28 = arith.constant 0.000000e+00 : f32
    %90 = vector.broadcast %cst_28 : f32 to vector<2x4x64xf32>
    %cst_29 = arith.constant dense<0.000000e+00> : vector<2x4x16xf32>
    %91 = vector.multi_reduction <add>, %89, %cst_29 [3] : vector<2x4x16x64xf32> to vector<2x4x16xf32>
    %cst_30 = arith.constant 2.500000e-01 : f32
    %92 = vector.broadcast %cst_30 : f32 to vector<2x4x16xf32>
    %93 = arith.mulf %91, %92 : vector<2x4x16xf32>
    %94 = arith.mulf %93, %93 : vector<2x4x16xf32>
    %cst_31 = arith.constant dense<0.000000e+00> : vector<2x4xf32>
    %95 = vector.multi_reduction <add>, %94, %cst_31 [2] : vector<2x4x16xf32> to vector<2x4xf32>
    %96 = vector.shape_cast %95 : vector<2x4xf32> to vector<2x4x1xf32>
    %97 = math.sqrt %96 : vector<2x4x1xf32>
    %cst_32 = arith.constant 1.000000e+00 : f32
    %98 = vector.broadcast %cst_32 : f32 to vector<2x4x1xf32>
    %99 = arith.addf %98, %96 : vector<2x4x1xf32>
    %100 = tpu.reciprocal %99 {approx = true} : vector<2x4x1xf32> -> vector<2x4x1xf32>
    %101 = arith.mulf %97, %100 : vector<2x4x1xf32>
    %102 = vector.shape_cast %93 : vector<2x4x16xf32> to vector<2x4x16x1xf32>
    %103 = vector.broadcast %102 : vector<2x4x16x1xf32> to vector<2x4x16x64xf32>
    %104 = arith.mulf %89, %103 : vector<2x4x16x64xf32>
    %cst_33 = arith.constant dense<0.000000e+00> : vector<2x4x64xf32>
    %105 = vector.multi_reduction <add>, %104, %cst_33 [2] : vector<2x4x16x64xf32> to vector<2x4x64xf32>
    %106 = vector.broadcast %101 : vector<2x4x1xf32> to vector<2x4x64xf32>
    %107 = arith.mulf %106, %105 : vector<2x4x64xf32>
    %108 = arith.addf %90, %107 : vector<2x4x64xf32>
    %cst_34 = arith.constant dense<0xFF800000> : vector<2x64xf32>
    %109 = vector.multi_reduction <maximumf>, %108, %cst_34 [1] : vector<2x4x64xf32> to vector<2x64xf32>
    %110 = vector.shape_cast %109 : vector<2x64xf32> to vector<2x1x64xf32>
    %111 = vector.broadcast %110 : vector<2x1x64xf32> to vector<2x4x64xf32>
    %112 = arith.subf %108, %111 : vector<2x4x64xf32>
    %113 = math.exp %112 : vector<2x4x64xf32>
    %cst_35 = arith.constant dense<0.000000e+00> : vector<2x64xf32>
    %114 = vector.multi_reduction <add>, %113, %cst_35 [1] : vector<2x4x64xf32> to vector<2x64xf32>
    %115 = vector.shape_cast %114 : vector<2x64xf32> to vector<2x1x64xf32>
    %116 = tpu.reciprocal %115 {approx = true} : vector<2x1x64xf32> -> vector<2x1x64xf32>
    %117 = vector.broadcast %116 : vector<2x1x64xf32> to vector<2x4x64xf32>
    %118 = arith.mulf %113, %117 : vector<2x4x64xf32>
    %119 = vector.shape_cast %118 : vector<2x4x64xf32> to vector<2x4x1x64xf32>
    %120 = vector.broadcast %119 : vector<2x4x1x64xf32> to vector<2x4x16x64xf32>
    %121 = arith.mulf %89, %120 : vector<2x4x16x64xf32>
    %cst_36 = arith.constant dense<0.000000e+00> : vector<2x4x16xf32>
    %122 = vector.multi_reduction <add>, %121, %cst_36 [3] : vector<2x4x16x64xf32> to vector<2x4x16xf32>
    %123 = arith.mulf %122, %122 : vector<2x4x16xf32>
    %cst_37 = arith.constant dense<0.000000e+00> : vector<2x4xf32>
    %124 = vector.multi_reduction <add>, %123, %cst_37 [2] : vector<2x4x16xf32> to vector<2x4xf32>
    %125 = vector.shape_cast %124 : vector<2x4xf32> to vector<2x4x1xf32>
    %126 = math.sqrt %125 : vector<2x4x1xf32>
    %cst_38 = arith.constant 1.000000e+00 : f32
    %127 = vector.broadcast %cst_38 : f32 to vector<2x4x1xf32>
    %128 = arith.addf %127, %125 : vector<2x4x1xf32>
    %129 = tpu.reciprocal %128 {approx = true} : vector<2x4x1xf32> -> vector<2x4x1xf32>
    %130 = arith.mulf %126, %129 : vector<2x4x1xf32>
    %131 = vector.shape_cast %122 : vector<2x4x16xf32> to vector<2x4x16x1xf32>
    %132 = vector.broadcast %131 : vector<2x4x16x1xf32> to vector<2x4x16x64xf32>
    %133 = arith.mulf %89, %132 : vector<2x4x16x64xf32>
    %cst_39 = arith.constant dense<0.000000e+00> : vector<2x4x64xf32>
    %134 = vector.multi_reduction <add>, %133, %cst_39 [2] : vector<2x4x16x64xf32> to vector<2x4x64xf32>
    %135 = vector.broadcast %130 : vector<2x4x1xf32> to vector<2x4x64xf32>
    %136 = arith.mulf %135, %134 : vector<2x4x64xf32>
    %137 = arith.addf %108, %136 : vector<2x4x64xf32>
    %cst_40 = arith.constant dense<0xFF800000> : vector<2x64xf32>
    %138 = vector.multi_reduction <maximumf>, %137, %cst_40 [1] : vector<2x4x64xf32> to vector<2x64xf32>
    %139 = vector.shape_cast %138 : vector<2x64xf32> to vector<2x1x64xf32>
    %140 = vector.broadcast %139 : vector<2x1x64xf32> to vector<2x4x64xf32>
    %141 = arith.subf %137, %140 : vector<2x4x64xf32>
    %142 = math.exp %141 : vector<2x4x64xf32>
    %cst_41 = arith.constant dense<0.000000e+00> : vector<2x64xf32>
    %143 = vector.multi_reduction <add>, %142, %cst_41 [1] : vector<2x4x64xf32> to vector<2x64xf32>
    %144 = vector.shape_cast %143 : vector<2x64xf32> to vector<2x1x64xf32>
    %145 = tpu.reciprocal %144 {approx = true} : vector<2x1x64xf32> -> vector<2x1x64xf32>
    %146 = vector.broadcast %145 : vector<2x1x64xf32> to vector<2x4x64xf32>
    %147 = arith.mulf %142, %146 : vector<2x4x64xf32>
    %148 = vector.shape_cast %147 : vector<2x4x64xf32> to vector<2x4x1x64xf32>
    %149 = vector.broadcast %148 : vector<2x4x1x64xf32> to vector<2x4x16x64xf32>
    %150 = arith.mulf %89, %149 : vector<2x4x16x64xf32>
    %cst_42 = arith.constant dense<0.000000e+00> : vector<2x4x16xf32>
    %151 = vector.multi_reduction <add>, %150, %cst_42 [3] : vector<2x4x16x64xf32> to vector<2x4x16xf32>
    %152 = arith.mulf %151, %151 : vector<2x4x16xf32>
    %cst_43 = arith.constant dense<0.000000e+00> : vector<2x4xf32>
    %153 = vector.multi_reduction <add>, %152, %cst_43 [2] : vector<2x4x16xf32> to vector<2x4xf32>
    %154 = vector.shape_cast %153 : vector<2x4xf32> to vector<2x4x1xf32>
    %155 = math.sqrt %154 : vector<2x4x1xf32>
    %cst_44 = arith.constant 1.000000e+00 : f32
    %156 = vector.broadcast %cst_44 : f32 to vector<2x4x1xf32>
    %157 = arith.addf %156, %154 : vector<2x4x1xf32>
    %158 = tpu.reciprocal %157 {approx = true} : vector<2x4x1xf32> -> vector<2x4x1xf32>
    %159 = arith.mulf %155, %158 : vector<2x4x1xf32>
    %160 = vector.broadcast %159 : vector<2x4x1xf32> to vector<2x4x16xf32>
    %161 = arith.mulf %160, %151 : vector<2x4x16xf32>
    %c0_45 = arith.constant 0 : index
    %c0_46 = arith.constant 0 : index
    %c0_47 = arith.constant 0 : index
    %162 = vector.load %arg3[%c0_45, %c0_46, %c0_47] : memref<2x4x16xf32, #tpu.memory_space<vmem>>, vector<2x4x16xf32>
    tpu.vector_store %arg3[%c0_45, %c0_46, %c0_47], %161 {strides = array<i32>} : memref<2x4x16xf32, #tpu.memory_space<vmem>>, vector<2x4x16xf32>,
    return
  }
  func.func @transform_0(%arg0: i32) -> (i32, i32, i32) {
    %c0_i32 = arith.constant 0 : i32
    %c0_i32_0 = arith.constant 0 : i32
    %c0_i32_1 = arith.constant 0 : i32
    return %arg0, %c0_i32, %c0_i32_0 : i32, i32, i32
  }
  func.func @transform_1(%arg0: i32) -> (i32, i32, i32, i32) {
    %c0_i32 = arith.constant 0 : i32
    %c0_i32_0 = arith.constant 0 : i32
    %c0_i32_1 = arith.constant 0 : i32
    %c0_i32_2 = arith.constant 0 : i32
    %c0_i32_3 = arith.constant 0 : i32
    return %c0_i32, %c0_i32_0, %c0_i32_1, %c0_i32_2 : i32, i32, i32, i32
  }
  func.func @transform_2(%arg0: i32) -> (i32, i32, i32) {
    %c0_i32 = arith.constant 0 : i32
    %c0_i32_0 = arith.constant 0 : i32
    %c0_i32_1 = arith.constant 0 : i32
    return %arg0, %c0_i32, %c0_i32_0 : i32, i32, i32
  }
}

</mosaic_0001>

<llo_original>
// kernel: tpu_custom_call.1
$region0: #{tpu_custom_call.1}
  #allocation0 [shape = 'u32[]', space=smem, size = 0x4, offset = 0x4, fixed_abs, tag = 'smem constant byte address 0x4 - core index']
  #allocation1 [shape = 'u32[72,128]{1,0:T(1,128)}', space=vmem, size = 0x9000, scoped, tag = 'internal scratch']
  %s0 = inlined_call_operand.hbm [shape: f32[2,8,64], index: 0, kind: input, shape index: {}]
  %s1 = inlined_call_operand.hbm [shape: f32[8,4,16,64], index: 1, kind: input, shape index: {}]
  %s2 = inlined_call_operand.hbm [shape: f32[2,4,16], index: 2, kind: output, shape index: {}]
  %s3 = sld [smem:[#allocation0]]
  $region26: #{tpu_custom_call.1} parent=0
    _
  %s5 = ssub.s32 1, %s3
  %s6 = scalar_select 0, %s5, %s3
  $region1: #{tpu_custom_call.1} parent=0
    #allocation2 [shape = 'u8[8192]{0}', space=vmem, size = 0x2000, scoped, tag = 'input window, operand 0, single buffered']
    #allocation3 [shape = 's32[1]{0}', space=sflag, size = 0x4, scoped, tag = 'scoped memory for tpu_custom_call.1']
    #allocation4 [shape = 's32[1]{0}', space=sflag, size = 0x4, scoped, tag = 'scoped memory for tpu_custom_call.1']
    #allocation5 [shape = 'u8[262144]{0}', space=vmem, size = 0x40000, scoped, tag = 'input window, operand 1, single buffered']
    #allocation6 [shape = 's32[1]{0}', space=sflag, size = 0x4, scoped, tag = 'scoped memory for tpu_custom_call.1']
    #allocation7 [shape = 'u8[4096]{0}', space=vmem, size = 0x1000, scoped, tag = 'output window, operand 0, single buffered']
    %7 = vsyncpa [#allocation3], 0
    %8 = vsyncpa [#allocation6], 0
    %9 = vsyncpa [#allocation4], 0
    // Predicated region
    $region2: #{tpu_custom_call.1} parent=1 // pred_check
      _
    $region3: #{tpu_custom_call.1} parent=1 // pred_check_branch
      %11 = sbr.rel (0) target = $region5
    $region4: #{tpu_custom_call.1} parent=1 // pred_region
      %13 = vsyncadd [#allocation3], 0
      %s14 = sshll.u32 %s0, 4
      %s15 = int_to_ptr.hbm [resolvable:$true] %s14
      %s16 = sshll.u32 [#allocation2], 4
      %s17 = int_to_ptr.vmem [resolvable:$true] %s16
      %22 = dma.hbm_to_vmem [thread:$0]  %s15, 256, %s17, [#allocation3], 128, 128, 8
    $region5: #{tpu_custom_call.1} parent=1 // pred_fallthru
      _
    // Predicated region
    $region6: #{tpu_custom_call.1} parent=1 // pred_check
      _
    $region7: #{tpu_custom_call.1} parent=1 // pred_check_branch
      %24 = sbr.rel (0) target = $region9
    $region8: #{tpu_custom_call.1} parent=1 // pred_region
      %26 = vsyncadd [#allocation6], 0
      %s27 = sshll.u32 %s1, 4
      %s28 = int_to_ptr.hbm [resolvable:$true] %s27
      %s29 = sshll.u32 [#allocation5], 4
      %s30 = int_to_ptr.vmem [resolvable:$true] %s29
      %35 = dma.hbm_to_vmem [thread:$0]  %s28, 8192, %s30, [#allocation6], 128, 128, 8
    $region9: #{tpu_custom_call.1} parent=1 // pred_fallthru
      _
    // Predicated region
    $region10: #{tpu_custom_call.1} parent=1 // pred_check
      _
    $region11: #{tpu_custom_call.1} parent=1 // pred_check_branch
      %37 = sbr.rel (0) target = $region13
    $region12: #{tpu_custom_call.1} parent=1 // pred_region
      %39 = dma.done [#allocation3], 256
    $region13: #{tpu_custom_call.1} parent=1 // pred_fallthru
      _
    // Predicated region
    $region14: #{tpu_custom_call.1} parent=1 // pred_check
      _
    $region15: #{tpu_custom_call.1} parent=1 // pred_check_branch
      %41 = sbr.rel (0) target = $region17
    $region16: #{tpu_custom_call.1} parent=1 // pred_region
      %43 = dma.done [#allocation6], 8192
    $region17: #{tpu_custom_call.1} parent=1 // pred_fallthru
      _
    %v44 = vld [vmem:[#allocation2] sm:$0xff]
    %v45 = vld [vmem:[#allocation2 + $0x8] sm:$0xff]
    %v46 = vmul.f32 %v44, %v44
    %v47 = vmul.f32 %v45, %v45
    %vm48 = vcmask 523264
    %v49 = vsel %vm48, %v46, 0.0
    %v50 = vrot.slane %v49, 4
    %v51 = vadd.f32 %v49, %v50
    %v52 = vrot.slane %v51, 2
    %v53 = vadd.f32 %v51, %v52
    %v54 = vrot.slane %v53, 1
    %v55 = vadd.f32 %v53, %v54
    %v56 = vsel %vm48, %v47, 0.0
    %v57 = vrot.slane %v56, 4
    %v58 = vadd.f32 %v56, %v57
    %v59 = vrot.slane %v58, 2
    %v60 = vadd.f32 %v58, %v59
    %v61 = vrot.slane %v60, 1
    %v62 = vadd.f32 %v60, %v61
    %v63 = vrsqrt.pop %v55
    %v64 = vmul.f32 %v63, %v55
    %v65 = vmul.f32 %v64, %v63
    %v66 = vmul.f32 0.5, %v65
    %v67 = vsub.f32 1.5, %v66
    %v68 = vmul.f32 %v63, %v67
    %v69 = vmul.f32 %v55, %v68
    %vm70 = vcmp.eq.f32.partialorder %v55, inf
    %v71 = vsel %vm70, %v55, %v69
    %vm72 = vcmp.eq.f32.partialorder %v55, 0.0
    %v73 = vand.u32 %v55, 2147483648
    %v74 = vsel %vm72, %v73, %v71
    %v75 = vrsqrt.pop %v62
    %v76 = vmul.f32 %v75, %v62
    %v77 = vmul.f32 %v76, %v75
    %v78 = vmul.f32 0.5, %v77
    %v79 = vsub.f32 1.5, %v78
    %v80 = vmul.f32 %v75, %v79
    %v81 = vmul.f32 %v62, %v80
    %vm82 = vcmp.eq.f32.partialorder %v62, inf
    %v83 = vsel %vm82, %v62, %v81
    %vm84 = vcmp.eq.f32.partialorder %v62, 0.0
    %v85 = vand.u32 %v62, 2147483648
    %v86 = vsel %vm84, %v85, %v83
    %v87 = vadd.f32 %v55, 1.0
    %v88 = vadd.f32 %v62, 1.0
    %v89 = vrcp.pop %v87
    %v90 = vrcp.pop %v88
    %v91 = vmul.f32 %v74, %v89
    %v92 = vmul.f32 %v86, %v90
    %v93 = vmul.f32 %v44, %v91
    %v94 = vmul.f32 %v45, %v92
    %v95 = vld [vmem:[#allocation5] sm:$0xff]
    %v96 = vld [vmem:[#allocation5 + $0x8] sm:$0xff]
    %v97 = vld [vmem:[#allocation5 + $0x10] sm:$0xff]
    %v98 = vld [vmem:[#allocation5 + $0x18] sm:$0xff]
    %v99 = vld [vmem:[#allocation5 + $0x20] sm:$0xff]
    %v100 = vld [vmem:[#allocation5 + $0x28] sm:$0xff]
    %v101 = vld [vmem:[#allocation5 + $0x30] sm:$0xff]
    %v102 = vld [vmem:[#allocation5 + $0x38] sm:$0xff]
    %v103 = vperm.slane %v93, 0
    %v104 = vperm.slane %v94, 0
    %v105 = vmul.f32 %v103, %v95
    %v106 = vmul.f32 %v103, %v96
    %v107 = vmul.f32 %v103, %v97
    %v108 = vmul.f32 %v103, %v98
    %v109 = vmul.f32 %v103, %v99
    %v110 = vmul.f32 %v103, %v100
    %v111 = vmul.f32 %v103, %v101
    %v112 = vmul.f32 %v103, %v102
    %v113 = vmul.f32 %v104, %v95
    %v114 = vmul.f32 %v104, %v96
    %v115 = vmul.f32 %v104, %v97
    %v116 = vmul.f32 %v104, %v98
    %v117 = vmul.f32 %v104, %v99
    %v118 = vmul.f32 %v104, %v100
    %v119 = vmul.f32 %v104, %v101
    %v120 = vmul.f32 %v104, %v102
    %s121 = scalar_lea.vmem [#allocation5], 64
    %v122 = vld [vmem:[%s121] sm:$0xff]
    %v123 = vld [vmem:[%s121 + $0x8] sm:$0xff]
    %v124 = vld [vmem:[%s121 + $0x10] sm:$0xff]
    %v125 = vld [vmem:[%s121 + $0x18] sm:$0xff]
    %v126 = vld [vmem:[%s121 + $0x20] sm:$0xff]
    %v127 = vld [vmem:[%s121 + $0x28] sm:$0xff]
    %v128 = vld [vmem:[%s121 + $0x30] sm:$0xff]
    %v129 = vld [vmem:[%s121 + $0x38] sm:$0xff]
    %v130 = vperm.slane %v93, 1
    %v131 = vperm.slane %v94, 1
    %v132 = vmul.f32 %v130, %v122
    %v133 = vmul.f32 %v130, %v123
    %v134 = vmul.f32 %v130, %v124
    %v135 = vmul.f32 %v130, %v125
    %v136 = vmul.f32 %v130, %v126
    %v137 = vmul.f32 %v130, %v127
    %v138 = vmul.f32 %v130, %v128
    %v139 = vmul.f32 %v130, %v129
    %v140 = vmul.f32 %v131, %v122
    %v141 = vmul.f32 %v131, %v123
    %v142 = vmul.f32 %v131, %v124
    %v143 = vmul.f32 %v131, %v125
    %v144 = vmul.f32 %v131, %v126
    %v145 = vmul.f32 %v131, %v127
    %v146 = vmul.f32 %v131, %v128
    %v147 = vmul.f32 %v131, %v129
    %v148 = vadd.f32 %v105, %v132
    %v149 = vadd.f32 %v106, %v133
    %v150 = vadd.f32 %v107, %v134
    %v151 = vadd.f32 %v108, %v135
    %v152 = vadd.f32 %v109, %v136
    %v153 = vadd.f32 %v110, %v137
    %v154 = vadd.f32 %v111, %v138
    %v155 = vadd.f32 %v112, %v139
    %v156 = vadd.f32 %v113, %v140
    %v157 = vadd.f32 %v114, %v141
    %v158 = vadd.f32 %v115, %v142
    %v159 = vadd.f32 %v116, %v143
    %v160 = vadd.f32 %v117, %v144
    %v161 = vadd.f32 %v118, %v145
    %v162 = vadd.f32 %v119, %v146
    %v163 = vadd.f32 %v120, %v147
    %s164 = scalar_lea.vmem [#allocation5], 128
    %v165 = vld [vmem:[%s164] sm:$0xff]
    %v166 = vld [vmem:[%s164 + $0x8] sm:$0xff]
    %v167 = vld [vmem:[%s164 + $0x10] sm:$0xff]
    %v168 = vld [vmem:[%s164 + $0x18] sm:$0xff]
    %v169 = vld [vmem:[%s164 + $0x20] sm:$0xff]
    %v170 = vld [vmem:[%s164 + $0x28] sm:$0xff]
    %v171 = vld [vmem:[%s164 + $0x30] sm:$0xff]
    %v172 = vld [vmem:[%s164 + $0x38] sm:$0xff]
    %v173 = vperm.slane %v93, 2
    %v174 = vperm.slane %v94, 2
    %v175 = vmul.f32 %v173, %v165
    %v176 = vmul.f32 %v173, %v166
    %v177 = vmul.f32 %v173, %v167
    %v178 = vmul.f32 %v173, %v168
    %v179 = vmul.f32 %v173, %v169
    %v180 = vmul.f32 %v173, %v170
    %v181 = vmul.f32 %v173, %v171
    %v182 = vmul.f32 %v173, %v172
    %v183 = vmul.f32 %v174, %v165
    %v184 = vmul.f32 %v174, %v166
    %v185 = vmul.f32 %v174, %v167
    %v186 = vmul.f32 %v174, %v168
    %v187 = vmul.f32 %v174, %v169
    %v188 = vmul.f32 %v174, %v170
    %v189 = vmul.f32 %v174, %v171
    %v190 = vmul.f32 %v174, %v172
    %v191 = vadd.f32 %v148, %v175
    %v192 = vadd.f32 %v149, %v176
    %v193 = vadd.f32 %v150, %v177
    %v194 = vadd.f32 %v151, %v178
    %v195 = vadd.f32 %v152, %v179
    %v196 = vadd.f32 %v153, %v180
    %v197 = vadd.f32 %v154, %v181
    %v198 = vadd.f32 %v155, %v182
    %v199 = vadd.f32 %v156, %v183
    %v200 = vadd.f32 %v157, %v184
    %v201 = vadd.f32 %v158, %v185
    %v202 = vadd.f32 %v159, %v186
    %v203 = vadd.f32 %v160, %v187
    %v204 = vadd.f32 %v161, %v188
    %v205 = vadd.f32 %v162, %v189
    %v206 = vadd.f32 %v163, %v190
    %s207 = scalar_lea.vmem [#allocation5], 192
    %v208 = vld [vmem:[%s207] sm:$0xff]
    %v209 = vld [vmem:[%s207 + $0x8] sm:$0xff]
    %v210 = vld [vmem:[%s207 + $0x10] sm:$0xff]
    %v211 = vld [vmem:[%s207 + $0x18] sm:$0xff]
    %v212 = vld [vmem:[%s207 + $0x20] sm:$0xff]
    %v213 = vld [vmem:[%s207 + $0x28] sm:$0xff]
    %v214 = vld [vmem:[%s207 + $0x30] sm:$0xff]
    %v215 = vld [vmem:[%s207 + $0x38] sm:$0xff]
    %v216 = vperm.slane %v93, 3
    %v217 = vperm.slane %v94, 3
    %v218 = vmul.f32 %v216, %v208
    %v219 = vmul.f32 %v216, %v209
    %v220 = vmul.f32 %v216, %v210
    %v221 = vmul.f32 %v216, %v211
    %v222 = vmul.f32 %v216, %v212
    %v223 = vmul.f32 %v216, %v213
    %v224 = vmul.f32 %v216, %v214
    %v225 = vmul.f32 %v216, %v215
    %v226 = vmul.f32 %v217, %v208
    %v227 = vmul.f32 %v217, %v209
    %v228 = vmul.f32 %v217, %v210
    %v229 = vmul.f32 %v217, %v211
    %v230 = vmul.f32 %v217, %v212
    %v231 = vmul.f32 %v217, %v213
    %v232 = vmul.f32 %v217, %v214
    %v233 = vmul.f32 %v217, %v215
    %v234 = vadd.f32 %v191, %v218
    %v235 = vadd.f32 %v192, %v219
    %v236 = vadd.f32 %v193, %v220
    %v237 = vadd.f32 %v194, %v221
    %v238 = vadd.f32 %v195, %v222
    %v239 = vadd.f32 %v196, %v223
    %v240 = vadd.f32 %v197, %v224
    %v241 = vadd.f32 %v198, %v225
    %v242 = vadd.f32 %v199, %v226
    %v243 = vadd.f32 %v200, %v227
    %v244 = vadd.f32 %v201, %v228
    %v245 = vadd.f32 %v202, %v229
    %v246 = vadd.f32 %v203, %v230
    %v247 = vadd.f32 %v204, %v231
    %v248 = vadd.f32 %v205, %v232
    %v249 = vadd.f32 %v206, %v233
    %s250 = scalar_lea.vmem [#allocation5], 256
    %v251 = vld [vmem:[%s250] sm:$0xff]
    %v252 = vld [vmem:[%s250 + $0x8] sm:$0xff]
    %v253 = vld [vmem:[%s250 + $0x10] sm:$0xff]
    %v254 = vld [vmem:[%s250 + $0x18] sm:$0xff]
    %v255 = vld [vmem:[%s250 + $0x20] sm:$0xff]
    %v256 = vld [vmem:[%s250 + $0x28] sm:$0xff]
    %v257 = vld [vmem:[%s250 + $0x30] sm:$0xff]
    %v258 = vld [vmem:[%s250 + $0x38] sm:$0xff]
    %v259 = vperm.slane %v93, 4
    %v260 = vperm.slane %v94, 4
    %v261 = vmul.f32 %v259, %v251
    %v262 = vmul.f32 %v259, %v252
    %v263 = vmul.f32 %v259, %v253
    %v264 = vmul.f32 %v259, %v254
    %v265 = vmul.f32 %v259, %v255
    %v266 = vmul.f32 %v259, %v256
    %v267 = vmul.f32 %v259, %v257
    %v268 = vmul.f32 %v259, %v258
    %v269 = vmul.f32 %v260, %v251
    %v270 = vmul.f32 %v260, %v252
    %v271 = vmul.f32 %v260, %v253
    %v272 = vmul.f32 %v260, %v254
    %v273 = vmul.f32 %v260, %v255
    %v274 = vmul.f32 %v260, %v256
    %v275 = vmul.f32 %v260, %v257
    %v276 = vmul.f32 %v260, %v258
    %v277 = vadd.f32 %v234, %v261
    %v278 = vadd.f32 %v235, %v262
    %v279 = vadd.f32 %v236, %v263
    %v280 = vadd.f32 %v237, %v264
    %v281 = vadd.f32 %v238, %v265
    %v282 = vadd.f32 %v239, %v266
    %v283 = vadd.f32 %v240, %v267
    %v284 = vadd.f32 %v241, %v268
    %v285 = vadd.f32 %v242, %v269
    %v286 = vadd.f32 %v243, %v270
    %v287 = vadd.f32 %v244, %v271
    %v288 = vadd.f32 %v245, %v272
    %v289 = vadd.f32 %v246, %v273
    %v290 = vadd.f32 %v247, %v274
    %v291 = vadd.f32 %v248, %v275
    %v292 = vadd.f32 %v249, %v276
    %s293 = scalar_lea.vmem [#allocation5], 320
    %v294 = vld [vmem:[%s293] sm:$0xff]
    %v295 = vld [vmem:[%s293 + $0x8] sm:$0xff]
    %v296 = vld [vmem:[%s293 + $0x10] sm:$0xff]
    %v297 = vld [vmem:[%s293 + $0x18] sm:$0xff]
    %v298 = vld [vmem:[%s293 + $0x20] sm:$0xff]
    %v299 = vld [vmem:[%s293 + $0x28] sm:$0xff]
    %v300 = vld [vmem:[%s293 + $0x30] sm:$0xff]
    %v301 = vld [vmem:[%s293 + $0x38] sm:$0xff]
    %v302 = vperm.slane %v93, 5
    %v303 = vperm.slane %v94, 5
    %v304 = vmul.f32 %v302, %v294
    %v305 = vmul.f32 %v302, %v295
    %v306 = vmul.f32 %v302, %v296
    %v307 = vmul.f32 %v302, %v297
    %v308 = vmul.f32 %v302, %v298
    %v309 = vmul.f32 %v302, %v299
    %v310 = vmul.f32 %v302, %v300
    %v311 = vmul.f32 %v302, %v301
    %v312 = vmul.f32 %v303, %v294
    %v313 = vmul.f32 %v303, %v295
    %v314 = vmul.f32 %v303, %v296
    %v315 = vmul.f32 %v303, %v297
    %v316 = vmul.f32 %v303, %v298
    %v317 = vmul.f32 %v303, %v299
    %v318 = vmul.f32 %v303, %v300
    %v319 = vmul.f32 %v303, %v301
    %v320 = vadd.f32 %v277, %v304
    %v321 = vadd.f32 %v278, %v305
    %v322 = vadd.f32 %v279, %v306
    %v323 = vadd.f32 %v280, %v307
    %v324 = vadd.f32 %v281, %v308
    %v325 = vadd.f32 %v282, %v309
    %v326 = vadd.f32 %v283, %v310
    %v327 = vadd.f32 %v284, %v311
    %v328 = vadd.f32 %v285, %v312
    %v329 = vadd.f32 %v286, %v313
    %v330 = vadd.f32 %v287, %v314
    %v331 = vadd.f32 %v288, %v315
    %v332 = vadd.f32 %v289, %v316
    %v333 = vadd.f32 %v290, %v317
    %v334 = vadd.f32 %v291, %v318
    %v335 = vadd.f32 %v292, %v319
    %s336 = scalar_lea.vmem [#allocation5], 384
    %v337 = vld [vmem:[%s336] sm:$0xff]
    %v338 = vld [vmem:[%s336 + $0x8] sm:$0xff]
    %v339 = vld [vmem:[%s336 + $0x10] sm:$0xff]
    %v340 = vld [vmem:[%s336 + $0x18] sm:$0xff]
    %v341 = vld [vmem:[%s336 + $0x20] sm:$0xff]
    %v342 = vld [vmem:[%s336 + $0x28] sm:$0xff]
    %v343 = vld [vmem:[%s336 + $0x30] sm:$0xff]
    %v344 = vld [vmem:[%s336 + $0x38] sm:$0xff]
    %v345 = vperm.slane %v93, 6
    %v346 = vperm.slane %v94, 6
    %v347 = vmul.f32 %v345, %v337
    %v348 = vmul.f32 %v345, %v338
    %v349 = vmul.f32 %v345, %v339
    %v350 = vmul.f32 %v345, %v340
    %v351 = vmul.f32 %v345, %v341
    %v352 = vmul.f32 %v345, %v342
    %v353 = vmul.f32 %v345, %v343
    %v354 = vmul.f32 %v345, %v344
    %v355 = vmul.f32 %v346, %v337
    %v356 = vmul.f32 %v346, %v338
    %v357 = vmul.f32 %v346, %v339
    %v358 = vmul.f32 %v346, %v340
    %v359 = vmul.f32 %v346, %v341
    %v360 = vmul.f32 %v346, %v342
    %v361 = vmul.f32 %v346, %v343
    %v362 = vmul.f32 %v346, %v344
    %v363 = vadd.f32 %v320, %v347
    %v364 = vadd.f32 %v321, %v348
    %v365 = vadd.f32 %v322, %v349
    %v366 = vadd.f32 %v323, %v350
    %v367 = vadd.f32 %v324, %v351
    %v368 = vadd.f32 %v325, %v352
    %v369 = vadd.f32 %v326, %v353
    %v370 = vadd.f32 %v327, %v354
    %v371 = vadd.f32 %v328, %v355
    %v372 = vadd.f32 %v329, %v356
    %v373 = vadd.f32 %v330, %v357
    %v374 = vadd.f32 %v331, %v358
    %v375 = vadd.f32 %v332, %v359
    %v376 = vadd.f32 %v333, %v360
    %v377 = vadd.f32 %v334, %v361
    %v378 = vadd.f32 %v335, %v362
    %s379 = scalar_lea.vmem [#allocation5], 448
    %v380 = vld [vmem:[%s379] sm:$0xff]
    %v381 = vld [vmem:[%s379 + $0x8] sm:$0xff]
    %v382 = vld [vmem:[%s379 + $0x10] sm:$0xff]
    %v383 = vld [vmem:[%s379 + $0x18] sm:$0xff]
    %v384 = vld [vmem:[%s379 + $0x20] sm:$0xff]
    %v385 = vld [vmem:[%s379 + $0x28] sm:$0xff]
    %v386 = vld [vmem:[%s379 + $0x30] sm:$0xff]
    %v387 = vld [vmem:[%s379 + $0x38] sm:$0xff]
    %v388 = vperm.slane %v93, 7
    %v389 = vperm.slane %v94, 7
    %v390 = vmul.f32 %v388, %v380
    %v391 = vmul.f32 %v388, %v381
    %v392 = vmul.f32 %v388, %v382
    %v393 = vmul.f32 %v388, %v383
    %v394 = vmul.f32 %v388, %v384
    %v395 = vmul.f32 %v388, %v385
    %v396 = vmul.f32 %v388, %v386
    %v397 = vmul.f32 %v388, %v387
    %v398 = vmul.f32 %v389, %v380
    %v399 = vmul.f32 %v389, %v381
    %v400 = vmul.f32 %v389, %v382
    %v401 = vmul.f32 %v389, %v383
    %v402 = vmul.f32 %v389, %v384
    %v403 = vmul.f32 %v389, %v385
    %v404 = vmul.f32 %v389, %v386
    %v405 = vmul.f32 %v389, %v387
    %v406 = vadd.f32 %v363, %v390
    %v407 = vadd.f32 %v364, %v391
    %v408 = vadd.f32 %v365, %v392
    %v409 = vadd.f32 %v366, %v393
    %v410 = vadd.f32 %v367, %v394
    %v411 = vadd.f32 %v368, %v395
    %v412 = vadd.f32 %v369, %v396
    %v413 = vadd.f32 %v370, %v397
    %v414 = vadd.f32 %v371, %v398
    %v415 = vadd.f32 %v372, %v399
    %v416 = vadd.f32 %v373, %v400
    %v417 = vadd.f32 %v374, %v401
    %v418 = vadd.f32 %v375, %v402
    %v419 = vadd.f32 %v376, %v403
    %v420 = vadd.f32 %v377, %v404
    %v421 = vadd.f32 %v378, %v405
    %v422 = vsel %vm48, %v406, 0.0
    %423 = vadd.xlane.f32.xlu0 %v422
    %v424 = vpop.xlane.xlu0 %423
    %v425 = vsel %vm48, %v407, 0.0
    %426 = vadd.xlane.f32.xlu0 %v425
    %v427 = vpop.xlane.xlu0 %426
    %v428 = vsel %vm48, %v408, 0.0
    %429 = vadd.xlane.f32.xlu0 %v428
    %v430 = vpop.xlane.xlu0 %429
    %v431 = vsel %vm48, %v409, 0.0
    %432 = vadd.xlane.f32.xlu0 %v431
    %v433 = vpop.xlane.xlu0 %432
    %v434 = vsel %vm48, %v410, 0.0
    %435 = vadd.xlane.f32.xlu0 %v434
    %v436 = vpop.xlane.xlu0 %435
    %v437 = vsel %vm48, %v411, 0.0
    %438 = vadd.xlane.f32.xlu0 %v437
    %v439 = vpop.xlane.xlu0 %438
    %v440 = vsel %vm48, %v412, 0.0
    %441 = vadd.xlane.f32.xlu0 %v440
    %v442 = vpop.xlane.xlu0 %441
    %v443 = vsel %vm48, %v413, 0.0
    %444 = vadd.xlane.f32.xlu0 %v443
    %v445 = vpop.xlane.xlu0 %444
    %v446 = vsel %vm48, %v414, 0.0
    %447 = vadd.xlane.f32.xlu0 %v446
    %v448 = vpop.xlane.xlu0 %447
    %v449 = vsel %vm48, %v415, 0.0
    %450 = vadd.xlane.f32.xlu0 %v449
    %v451 = vpop.xlane.xlu0 %450
    %v452 = vsel %vm48, %v416, 0.0
    %453 = vadd.xlane.f32.xlu0 %v452
    %v454 = vpop.xlane.xlu0 %453
    %v455 = vsel %vm48, %v417, 0.0
    %456 = vadd.xlane.f32.xlu0 %v455
    %v457 = vpop.xlane.xlu0 %456
    %v458 = vsel %vm48, %v418, 0.0
    %459 = vadd.xlane.f32.xlu0 %v458
    %v460 = vpop.xlane.xlu0 %459
    %v461 = vsel %vm48, %v419, 0.0
    %462 = vadd.xlane.f32.xlu0 %v461
    %v463 = vpop.xlane.xlu0 %462
    %v464 = vsel %vm48, %v420, 0.0
    %465 = vadd.xlane.f32.xlu0 %v464
    %v466 = vpop.xlane.xlu0 %465
    %v467 = vsel %vm48, %v421, 0.0
    %468 = vadd.xlane.f32.xlu0 %v467
    %v469 = vpop.xlane.xlu0 %468
    %v470 = vmul.f32 %v424, 0.25
    %v471 = vmul.f32 %v427, 0.25
    %v472 = vmul.f32 %v430, 0.25
    %v473 = vmul.f32 %v433, 0.25
    %v474 = vmul.f32 %v436, 0.25
    %v475 = vmul.f32 %v439, 0.25
    %v476 = vmul.f32 %v442, 0.25
    %v477 = vmul.f32 %v445, 0.25
    %v478 = vmul.f32 %v448, 0.25
    %v479 = vmul.f32 %v451, 0.25
    %v480 = vmul.f32 %v454, 0.25
    %v481 = vmul.f32 %v457, 0.25
    %v482 = vmul.f32 %v460, 0.25
    %v483 = vmul.f32 %v463, 0.25
    %v484 = vmul.f32 %v466, 0.25
    %v485 = vmul.f32 %v469, 0.25
    %v486 = vmul.f32 %v470, %v470
    %v487 = vmul.f32 %v471, %v471
    %v488 = vmul.f32 %v472, %v472
    %v489 = vmul.f32 %v473, %v473
    %v490 = vmul.f32 %v474, %v474
    %v491 = vmul.f32 %v475, %v475
    %v492 = vmul.f32 %v476, %v476
    %v493 = vmul.f32 %v477, %v477
    %v494 = vmul.f32 %v478, %v478
    %v495 = vmul.f32 %v479, %v479
    %v496 = vmul.f32 %v480, %v480
    %v497 = vmul.f32 %v481, %v481
    %v498 = vmul.f32 %v482, %v482
    %v499 = vmul.f32 %v483, %v483
    %v500 = vmul.f32 %v484, %v484
    %v501 = vmul.f32 %v485, %v485
    %v518 = vlaneseq
    %v519 = vand.u32 %v518, 127
    %v520 = vperm.slane %v486, %v519
    %v521 = vadd.s32 %v519, 4294967288
    %v522 = vperm.slane %v487, %v521
    %vm523 = vcmask 130112
    %v524 = vsel %vm523, %v522, %v520
    %v525 = vperm.slane %v488, %v519
    %v526 = vperm.slane %v489, %v521
    %v527 = vsel %vm523, %v526, %v525
    %v528 = vperm.slane %v490, %v519
    %v529 = vperm.slane %v491, %v521
    %v530 = vsel %vm523, %v529, %v528
    %v531 = vperm.slane %v492, %v519
    %v532 = vperm.slane %v493, %v521
    %v533 = vsel %vm523, %v532, %v531
    %v534 = vperm.slane %v494, %v519
    %v535 = vperm.slane %v495, %v521
    %v536 = vsel %vm523, %v535, %v534
    %v537 = vperm.slane %v496, %v519
    %v538 = vperm.slane %v497, %v521
    %v539 = vsel %vm523, %v538, %v537
    %v540 = vperm.slane %v498, %v519
    %v541 = vperm.slane %v499, %v521
    %v542 = vsel %vm523, %v541, %v540
    %v543 = vperm.slane %v500, %v519
    %v544 = vperm.slane %v501, %v521
    %v545 = vsel %vm523, %v544, %v543
    %vm546 = vcmask 1041409
    %v547 = vsel %vm546, %v527, %v524
    %vm548 = vcmask 1042434
    %v549 = vsel %vm548, %v530, %v547
    %vm550 = vcmask 1043459
    %v551 = vsel %vm550, %v533, %v549
    %v552 = vsel %vm546, %v539, %v536
    %v553 = vsel %vm548, %v542, %v552
    %v554 = vsel %vm550, %v545, %v553
    %vm557 = vcmask 125952
    %v558 = vsel %vm557, %v551, 0.0
    %559 = vadd.xlane.f32.xlu0 %v558
    %v560 = vpop.xlane.xlu0 %559
    %v561 = vsel %vm557, %v554, 0.0
    %562 = vadd.xlane.f32.xlu0 %v561
    %v563 = vpop.xlane.xlu0 %562
    %v564 = vrsqrt.pop %v560
    %v565 = vmul.f32 %v564, %v560
    %v566 = vmul.f32 %v565, %v564
    %v567 = vmul.f32 0.5, %v566
    %v568 = vsub.f32 1.5, %v567
    %v569 = vmul.f32 %v564, %v568
    %v570 = vmul.f32 %v560, %v569
    %vm571 = vcmp.eq.f32.partialorder %v560, inf
    %v572 = vsel %vm571, %v560, %v570
    %vm573 = vcmp.eq.f32.partialorder %v560, 0.0
    %v574 = vand.u32 %v560, 2147483648
    %v575 = vsel %vm573, %v574, %v572
    %v576 = vrsqrt.pop %v563
    %v577 = vmul.f32 %v576, %v563
    %v578 = vmul.f32 %v577, %v576
    %v579 = vmul.f32 0.5, %v578
    %v580 = vsub.f32 1.5, %v579
    %v581 = vmul.f32 %v576, %v580
    %v582 = vmul.f32 %v563, %v581
    %vm583 = vcmp.eq.f32.partialorder %v563, inf
    %v584 = vsel %vm583, %v563, %v582
    %vm585 = vcmp.eq.f32.partialorder %v563, 0.0
    %v586 = vand.u32 %v563, 2147483648
    %v587 = vsel %vm585, %v586, %v584
    %v588 = vadd.f32 %v560, 1.0
    %v589 = vadd.f32 %v563, 1.0
    %v590 = vrcp.pop %v588
    %v591 = vrcp.pop %v589
    %v592 = vmul.f32 %v575, %v590
    %v593 = vmul.f32 %v587, %v591
    %v594 = vmul.f32 %v406, %v470
    %v595 = vmul.f32 %v407, %v471
    %v596 = vmul.f32 %v408, %v472
    %v597 = vmul.f32 %v409, %v473
    %v598 = vmul.f32 %v410, %v474
    %v599 = vmul.f32 %v411, %v475
    %v600 = vmul.f32 %v412, %v476
    %v601 = vmul.f32 %v413, %v477
    %v602 = vmul.f32 %v414, %v478
    %v603 = vmul.f32 %v415, %v479
    %v604 = vmul.f32 %v416, %v480
    %v605 = vmul.f32 %v417, %v481
    %v606 = vmul.f32 %v418, %v482
    %v607 = vmul.f32 %v419, %v483
    %v608 = vmul.f32 %v420, %v484
    %v609 = vmul.f32 %v421, %v485
    %v610 = vsel %vm48, %v594, 0.0
    %v611 = vsel %vm48, %v595, 0.0
    %v612 = vadd.f32 %v610, %v611
    %v613 = vrot.slane %v612, 4
    %v614 = vadd.f32 %v612, %v613
    %v615 = vrot.slane %v614, 2
    %v616 = vadd.f32 %v614, %v615
    %v617 = vrot.slane %v616, 1
    %v618 = vadd.f32 %v616, %v617
    %v619 = vsel %vm48, %v596, 0.0
    %v620 = vsel %vm48, %v597, 0.0
    %v621 = vadd.f32 %v619, %v620
    %v622 = vrot.slane %v621, 4
    %v623 = vadd.f32 %v621, %v622
    %v624 = vrot.slane %v623, 2
    %v625 = vadd.f32 %v623, %v624
    %v626 = vrot.slane %v625, 1
    %v627 = vadd.f32 %v625, %v626
    %v628 = vsel %vm48, %v598, 0.0
    %v629 = vsel %vm48, %v599, 0.0
    %v630 = vadd.f32 %v628, %v629
    %v631 = vrot.slane %v630, 4
    %v632 = vadd.f32 %v630, %v631
    %v633 = vrot.slane %v632, 2
    %v634 = vadd.f32 %v632, %v633
    %v635 = vrot.slane %v634, 1
    %v636 = vadd.f32 %v634, %v635
    %v637 = vsel %vm48, %v600, 0.0
    %v638 = vsel %vm48, %v601, 0.0
    %v639 = vadd.f32 %v637, %v638
    %v640 = vrot.slane %v639, 4
    %v641 = vadd.f32 %v639, %v640
    %v642 = vrot.slane %v641, 2
    %v643 = vadd.f32 %v641, %v642
    %v644 = vrot.slane %v643, 1
    %v645 = vadd.f32 %v643, %v644
    %v646 = vsel %vm48, %v602, 0.0
    %v647 = vsel %vm48, %v603, 0.0
    %v648 = vadd.f32 %v646, %v647
    %v649 = vrot.slane %v648, 4
    %v650 = vadd.f32 %v648, %v649
    %v651 = vrot.slane %v650, 2
    %v652 = vadd.f32 %v650, %v651
    %v653 = vrot.slane %v652, 1
    %v654 = vadd.f32 %v652, %v653
    %v655 = vsel %vm48, %v604, 0.0
    %v656 = vsel %vm48, %v605, 0.0
    %v657 = vadd.f32 %v655, %v656
    %v658 = vrot.slane %v657, 4
    %v659 = vadd.f32 %v657, %v658
    %v660 = vrot.slane %v659, 2
    %v661 = vadd.f32 %v659, %v660
    %v662 = vrot.slane %v661, 1
    %v663 = vadd.f32 %v661, %v662
    %v664 = vsel %vm48, %v606, 0.0
    %v665 = vsel %vm48, %v607, 0.0
    %v666 = vadd.f32 %v664, %v665
    %v667 = vrot.slane %v666, 4
    %v668 = vadd.f32 %v666, %v667
    %v669 = vrot.slane %v668, 2
    %v670 = vadd.f32 %v668, %v669
    %v671 = vrot.slane %v670, 1
    %v672 = vadd.f32 %v670, %v671
    %v673 = vsel %vm48, %v608, 0.0
    %v674 = vsel %vm48, %v609, 0.0
    %v675 = vadd.f32 %v673, %v674
    %v676 = vrot.slane %v675, 4
    %v677 = vadd.f32 %v675, %v676
    %v678 = vrot.slane %v677, 2
    %v679 = vadd.f32 %v677, %v678
    %v680 = vrot.slane %v679, 1
    %v681 = vadd.f32 %v679, %v680
    %v690 = vsel %vm546, %v627, %v618
    %v691 = vsel %vm548, %v636, %v690
    %v692 = vsel %vm550, %v645, %v691
    %v693 = vsel %vm546, %v663, %v654
    %v694 = vsel %vm548, %v672, %v693
    %v695 = vsel %vm550, %v681, %v694
    %v698 = vmul.f32 %v592, %v692
    %v699 = vmul.f32 %v593, %v695
    %v700 = vadd.f32 %v698, 0.0
    %v701 = vadd.f32 %v699, 0.0
    %vm702 = vcmask 519168
    %v703 = vsel %vm702, %v700, -inf
    %v704 = vrot.slane %v703, 4
    %v705 = vmax.f32 %v703, %v704
    %v706 = vrot.slane %v705, 2
    %v707 = vmax.f32 %v705, %v706
    %v708 = vrot.slane %v707, 1
    %v709 = vmax.f32 %v707, %v708
    %v710 = vsel %vm702, %v701, -inf
    %v711 = vrot.slane %v710, 4
    %v712 = vmax.f32 %v710, %v711
    %v713 = vrot.slane %v712, 2
    %v714 = vmax.f32 %v712, %v713
    %v715 = vrot.slane %v714, 1
    %v716 = vmax.f32 %v714, %v715
    %v717 = vsub.f32 %v700, %v709
    %v718 = vsub.f32 %v701, %v716
    %v719 = vmul.f32 %v717, 1.442695
    %v720 = vpow.pop %v719
    %v721 = vmul.f32 %v718, 1.442695
    %v722 = vpow.pop %v721
    %v723 = vsel %vm702, %v720, 0.0
    %v724 = vrot.slane %v723, 4
    %v725 = vadd.f32 %v723, %v724
    %v726 = vrot.slane %v725, 2
    %v727 = vadd.f32 %v725, %v726
    %v728 = vrot.slane %v727, 1
    %v729 = vadd.f32 %v727, %v728
    %v730 = vsel %vm702, %v722, 0.0
    %v731 = vrot.slane %v730, 4
    %v732 = vadd.f32 %v730, %v731
    %v733 = vrot.slane %v732, 2
    %v734 = vadd.f32 %v732, %v733
    %v735 = vrot.slane %v734, 1
    %v736 = vadd.f32 %v734, %v735
    %v737 = vrcp.pop %v729
    %v738 = vrcp.pop %v736
    %v739 = vmul.f32 %v720, %v737
    %v740 = vmul.f32 %v722, %v738
    %v743 = vrot.slane %v739, 1
    %v744 = vrot.slane %v739, 2
    %v745 = vrot.slane %v739, 3
    %v746 = vrot.slane %v740, 1
    %v747 = vrot.slane %v740, 2
    %v748 = vrot.slane %v740, 3
    %v749 = vperm.slane %v739, 0
    %v750 = vperm.slane %v743, 0
    %v751 = vperm.slane %v744, 0
    %v752 = vperm.slane %v745, 0
    %v753 = vperm.slane %v740, 0
    %v754 = vperm.slane %v746, 0
    %v755 = vperm.slane %v747, 0
    %v756 = vperm.slane %v748, 0
    %v765 = vmul.f32 %v406, %v749
    %v766 = vmul.f32 %v407, %v749
    %v767 = vmul.f32 %v408, %v750
    %v768 = vmul.f32 %v409, %v750
    %v769 = vmul.f32 %v410, %v751
    %v770 = vmul.f32 %v411, %v751
    %v771 = vmul.f32 %v412, %v752
    %v772 = vmul.f32 %v413, %v752
    %v773 = vmul.f32 %v414, %v753
    %v774 = vmul.f32 %v415, %v753
    %v775 = vmul.f32 %v416, %v754
    %v776 = vmul.f32 %v417, %v754
    %v777 = vmul.f32 %v418, %v755
    %v778 = vmul.f32 %v419, %v755
    %v779 = vmul.f32 %v420, %v756
    %v780 = vmul.f32 %v421, %v756
    %v781 = vsel %vm48, %v765, 0.0
    %782 = vadd.xlane.f32.xlu0 %v781
    %v783 = vpop.xlane.xlu0 %782
    %v784 = vsel %vm48, %v766, 0.0
    %785 = vadd.xlane.f32.xlu0 %v784
    %v786 = vpop.xlane.xlu0 %785
    %v787 = vsel %vm48, %v767, 0.0
    %788 = vadd.xlane.f32.xlu0 %v787
    %v789 = vpop.xlane.xlu0 %788
    %v790 = vsel %vm48, %v768, 0.0
    %791 = vadd.xlane.f32.xlu0 %v790
    %v792 = vpop.xlane.xlu0 %791
    %v793 = vsel %vm48, %v769, 0.0
    %794 = vadd.xlane.f32.xlu0 %v793
    %v795 = vpop.xlane.xlu0 %794
    %v796 = vsel %vm48, %v770, 0.0
    %797 = vadd.xlane.f32.xlu0 %v796
    %v798 = vpop.xlane.xlu0 %797
    %v799 = vsel %vm48, %v771, 0.0
    %800 = vadd.xlane.f32.xlu0 %v799
    %v801 = vpop.xlane.xlu0 %800
    %v802 = vsel %vm48, %v772, 0.0
    %803 = vadd.xlane.f32.xlu0 %v802
    %v804 = vpop.xlane.xlu0 %803
    %v805 = vsel %vm48, %v773, 0.0
    %806 = vadd.xlane.f32.xlu0 %v805
    %v807 = vpop.xlane.xlu0 %806
    %v808 = vsel %vm48, %v774, 0.0
    %809 = vadd.xlane.f32.xlu0 %v808
    %v810 = vpop.xlane.xlu0 %809
    %v811 = vsel %vm48, %v775, 0.0
    %812 = vadd.xlane.f32.xlu0 %v811
    %v813 = vpop.xlane.xlu0 %812
    %v814 = vsel %vm48, %v776, 0.0
    %815 = vadd.xlane.f32.xlu0 %v814
    %v816 = vpop.xlane.xlu0 %815
    %v817 = vsel %vm48, %v777, 0.0
    %818 = vadd.xlane.f32.xlu0 %v817
    %v819 = vpop.xlane.xlu0 %818
    %v820 = vsel %vm48, %v778, 0.0
    %821 = vadd.xlane.f32.xlu0 %v820
    %v822 = vpop.xlane.xlu0 %821
    %v823 = vsel %vm48, %v779, 0.0
    %824 = vadd.xlane.f32.xlu0 %v823
    %v825 = vpop.xlane.xlu0 %824
    %v826 = vsel %vm48, %v780, 0.0
    %827 = vadd.xlane.f32.xlu0 %v826
    %v828 = vpop.xlane.xlu0 %827
    %v829 = vmul.f32 %v783, %v783
    %v830 = vmul.f32 %v786, %v786
    %v831 = vmul.f32 %v789, %v789
    %v832 = vmul.f32 %v792, %v792
    %v833 = vmul.f32 %v795, %v795
    %v834 = vmul.f32 %v798, %v798
    %v835 = vmul.f32 %v801, %v801
    %v836 = vmul.f32 %v804, %v804
    %v837 = vmul.f32 %v807, %v807
    %v838 = vmul.f32 %v810, %v810
    %v839 = vmul.f32 %v813, %v813
    %v840 = vmul.f32 %v816, %v816
    %v841 = vmul.f32 %v819, %v819
    %v842 = vmul.f32 %v822, %v822
    %v843 = vmul.f32 %v825, %v825
    %v844 = vmul.f32 %v828, %v828
    %v861 = vperm.slane %v829, %v519
    %v862 = vperm.slane %v830, %v521
    %v863 = vsel %vm523, %v862, %v861
    %v864 = vperm.slane %v831, %v519
    %v865 = vperm.slane %v832, %v521
    %v866 = vsel %vm523, %v865, %v864
    %v867 = vperm.slane %v833, %v519
    %v868 = vperm.slane %v834, %v521
    %v869 = vsel %vm523, %v868, %v867
    %v870 = vperm.slane %v835, %v519
    %v871 = vperm.slane %v836, %v521
    %v872 = vsel %vm523, %v871, %v870
    %v873 = vperm.slane %v837, %v519
    %v874 = vperm.slane %v838, %v521
    %v875 = vsel %vm523, %v874, %v873
    %v876 = vperm.slane %v839, %v519
    %v877 = vperm.slane %v840, %v521
    %v878 = vsel %vm523, %v877, %v876
    %v879 = vperm.slane %v841, %v519
    %v880 = vperm.slane %v842, %v521
    %v881 = vsel %vm523, %v880, %v879
    %v882 = vperm.slane %v843, %v519
    %v883 = vperm.slane %v844, %v521
    %v884 = vsel %vm523, %v883, %v882
    %v885 = vsel %vm546, %v866, %v863
    %v886 = vsel %vm548, %v869, %v885
    %v887 = vsel %vm550, %v872, %v886
    %v888 = vsel %vm546, %v878, %v875
    %v889 = vsel %vm548, %v881, %v888
    %v890 = vsel %vm550, %v884, %v889
    %v893 = vsel %vm557, %v887, 0.0
    %894 = vadd.xlane.f32.xlu0 %v893
    %v895 = vpop.xlane.xlu0 %894
    %v896 = vsel %vm557, %v890, 0.0
    %897 = vadd.xlane.f32.xlu0 %v896
    %v898 = vpop.xlane.xlu0 %897
    %v899 = vrsqrt.pop %v895
    %v900 = vmul.f32 %v899, %v895
    %v901 = vmul.f32 %v900, %v899
    %v902 = vmul.f32 0.5, %v901
    %v903 = vsub.f32 1.5, %v902
    %v904 = vmul.f32 %v899, %v903
    %v905 = vmul.f32 %v895, %v904
    %vm906 = vcmp.eq.f32.partialorder %v895, inf
    %v907 = vsel %vm906, %v895, %v905
    %vm908 = vcmp.eq.f32.partialorder %v895, 0.0
    %v909 = vand.u32 %v895, 2147483648
    %v910 = vsel %vm908, %v909, %v907
    %v911 = vrsqrt.pop %v898
    %v912 = vmul.f32 %v911, %v898
    %v913 = vmul.f32 %v912, %v911
    %v914 = vmul.f32 0.5, %v913
    %v915 = vsub.f32 1.5, %v914
    %v916 = vmul.f32 %v911, %v915
    %v917 = vmul.f32 %v898, %v916
    %vm918 = vcmp.eq.f32.partialorder %v898, inf
    %v919 = vsel %vm918, %v898, %v917
    %vm920 = vcmp.eq.f32.partialorder %v898, 0.0
    %v921 = vand.u32 %v898, 2147483648
    %v922 = vsel %vm920, %v921, %v919
    %v923 = vadd.f32 %v895, 1.0
    %v924 = vadd.f32 %v898, 1.0
    %v925 = vrcp.pop %v923
    %v926 = vrcp.pop %v924
    %v927 = vmul.f32 %v910, %v925
    %v928 = vmul.f32 %v922, %v926
    %v929 = vmul.f32 %v406, %v783
    %v930 = vmul.f32 %v407, %v786
    %v931 = vmul.f32 %v408, %v789
    %v932 = vmul.f32 %v409, %v792
    %v933 = vmul.f32 %v410, %v795
    %v934 = vmul.f32 %v411, %v798
    %v935 = vmul.f32 %v412, %v801
    %v936 = vmul.f32 %v413, %v804
    %v937 = vmul.f32 %v414, %v807
    %v938 = vmul.f32 %v415, %v810
    %v939 = vmul.f32 %v416, %v813
    %v940 = vmul.f32 %v417, %v816
    %v941 = vmul.f32 %v418, %v819
    %v942 = vmul.f32 %v419, %v822
    %v943 = vmul.f32 %v420, %v825
    %v944 = vmul.f32 %v421, %v828
    %v945 = vsel %vm48, %v929, 0.0
    %v946 = vsel %vm48, %v930, 0.0
    %v947 = vadd.f32 %v945, %v946
    %v948 = vrot.slane %v947, 4
    %v949 = vadd.f32 %v947, %v948
    %v950 = vrot.slane %v949, 2
    %v951 = vadd.f32 %v949, %v950
    %v952 = vrot.slane %v951, 1
    %v953 = vadd.f32 %v951, %v952
    %v954 = vsel %vm48, %v931, 0.0
    %v955 = vsel %vm48, %v932, 0.0
    %v956 = vadd.f32 %v954, %v955
    %v957 = vrot.slane %v956, 4
    %v958 = vadd.f32 %v956, %v957
    %v959 = vrot.slane %v958, 2
    %v960 = vadd.f32 %v958, %v959
    %v961 = vrot.slane %v960, 1
    %v962 = vadd.f32 %v960, %v961
    %v963 = vsel %vm48, %v933, 0.0
    %v964 = vsel %vm48, %v934, 0.0
    %v965 = vadd.f32 %v963, %v964
    %v966 = vrot.slane %v965, 4
    %v967 = vadd.f32 %v965, %v966
    %v968 = vrot.slane %v967, 2
    %v969 = vadd.f32 %v967, %v968
    %v970 = vrot.slane %v969, 1
    %v971 = vadd.f32 %v969, %v970
    %v972 = vsel %vm48, %v935, 0.0
    %v973 = vsel %vm48, %v936, 0.0
    %v974 = vadd.f32 %v972, %v973
    %v975 = vrot.slane %v974, 4
    %v976 = vadd.f32 %v974, %v975
    %v977 = vrot.slane %v976, 2
    %v978 = vadd.f32 %v976, %v977
    %v979 = vrot.slane %v978, 1
    %v980 = vadd.f32 %v978, %v979
    %v981 = vsel %vm48, %v937, 0.0
    %v982 = vsel %vm48, %v938, 0.0
    %v983 = vadd.f32 %v981, %v982
    %v984 = vrot.slane %v983, 4
    %v985 = vadd.f32 %v983, %v984
    %v986 = vrot.slane %v985, 2
    %v987 = vadd.f32 %v985, %v986
    %v988 = vrot.slane %v987, 1
    %v989 = vadd.f32 %v987, %v988
    %v990 = vsel %vm48, %v939, 0.0
    %v991 = vsel %vm48, %v940, 0.0
    %v992 = vadd.f32 %v990, %v991
    %v993 = vrot.slane %v992, 4
    %v994 = vadd.f32 %v992, %v993
    %v995 = vrot.slane %v994, 2
    %v996 = vadd.f32 %v994, %v995
    %v997 = vrot.slane %v996, 1
    %v998 = vadd.f32 %v996, %v997
    %v999 = vsel %vm48, %v941, 0.0
    %v1000 = vsel %vm48, %v942, 0.0
    %v1001 = vadd.f32 %v999, %v1000
    %v1002 = vrot.slane %v1001, 4
    %v1003 = vadd.f32 %v1001, %v1002
    %v1004 = vrot.slane %v1003, 2
    %v1005 = vadd.f32 %v1003, %v1004
    %v1006 = vrot.slane %v1005, 1
    %v1007 = vadd.f32 %v1005, %v1006
    %v1008 = vsel %vm48, %v943, 0.0
    %v1009 = vsel %vm48, %v944, 0.0
    %v1010 = vadd.f32 %v1008, %v1009
    %v1011 = vrot.slane %v1010, 4
    %v1012 = vadd.f32 %v1010, %v1011
    %v1013 = vrot.slane %v1012, 2
    %v1014 = vadd.f32 %v1012, %v1013
    %v1015 = vrot.slane %v1014, 1
    %v1016 = vadd.f32 %v1014, %v1015
    %v1025 = vsel %vm546, %v962, %v953
    %v1026 = vsel %vm548, %v971, %v1025
    %v1027 = vsel %vm550, %v980, %v1026
    %v1028 = vsel %vm546, %v998, %v989
    %v1029 = vsel %vm548, %v1007, %v1028
    %v1030 = vsel %vm550, %v1016, %v1029
    %v1033 = vmul.f32 %v927, %v1027
    %v1034 = vmul.f32 %v928, %v1030
    %v1035 = vadd.f32 %v700, %v1033
    %v1036 = vadd.f32 %v701, %v1034
    %v1037 = vsel %vm702, %v1035, -inf
    %v1038 = vrot.slane %v1037, 4
    %v1039 = vmax.f32 %v1037, %v1038
    %v1040 = vrot.slane %v1039, 2
    %v1041 = vmax.f32 %v1039, %v1040
    %v1042 = vrot.slane %v1041, 1
    %v1043 = vmax.f32 %v1041, %v1042
    %v1044 = vsel %vm702, %v1036, -inf
    %v1045 = vrot.slane %v1044, 4
    %v1046 = vmax.f32 %v1044, %v1045
    %v1047 = vrot.slane %v1046, 2
    %v1048 = vmax.f32 %v1046, %v1047
    %v1049 = vrot.slane %v1048, 1
    %v1050 = vmax.f32 %v1048, %v1049
    %v1051 = vsub.f32 %v1035, %v1043
    %v1052 = vsub.f32 %v1036, %v1050
    %v1053 = vmul.f32 %v1051, 1.442695
    %v1054 = vpow.pop %v1053
    %v1055 = vmul.f32 %v1052, 1.442695
    %v1056 = vpow.pop %v1055
    %v1057 = vsel %vm702, %v1054, 0.0
    %v1058 = vrot.slane %v1057, 4
    %v1059 = vadd.f32 %v1057, %v1058
    %v1060 = vrot.slane %v1059, 2
    %v1061 = vadd.f32 %v1059, %v1060
    %v1062 = vrot.slane %v1061, 1
    %v1063 = vadd.f32 %v1061, %v1062
    %v1064 = vsel %vm702, %v1056, 0.0
    %v1065 = vrot.slane %v1064, 4
    %v1066 = vadd.f32 %v1064, %v1065
    %v1067 = vrot.slane %v1066, 2
    %v1068 = vadd.f32 %v1066, %v1067
    %v1069 = vrot.slane %v1068, 1
    %v1070 = vadd.f32 %v1068, %v1069
    %v1071 = vrcp.pop %v1063
    %v1072 = vrcp.pop %v1070
    %v1073 = vmul.f32 %v1054, %v1071
    %v1074 = vmul.f32 %v1056, %v1072
    %v1077 = vrot.slane %v1073, 1
    %v1078 = vrot.slane %v1073, 2
    %v1079 = vrot.slane %v1073, 3
    %v1080 = vrot.slane %v1074, 1
    %v1081 = vrot.slane %v1074, 2
    %v1082 = vrot.slane %v1074, 3
    %v1083 = vperm.slane %v1073, 0
    %v1084 = vperm.slane %v1077, 0
    %v1085 = vperm.slane %v1078, 0
    %v1086 = vperm.slane %v1079, 0
    %v1087 = vperm.slane %v1074, 0
    %v1088 = vperm.slane %v1080, 0
    %v1089 = vperm.slane %v1081, 0
    %v1090 = vperm.slane %v1082, 0
    %v1099 = vmul.f32 %v406, %v1083
    %v1100 = vmul.f32 %v407, %v1083
    %v1101 = vmul.f32 %v408, %v1084
    %v1102 = vmul.f32 %v409, %v1084
    %v1103 = vmul.f32 %v410, %v1085
    %v1104 = vmul.f32 %v411, %v1085
    %v1105 = vmul.f32 %v412, %v1086
    %v1106 = vmul.f32 %v413, %v1086
    %v1107 = vmul.f32 %v414, %v1087
    %v1108 = vmul.f32 %v415, %v1087
    %v1109 = vmul.f32 %v416, %v1088
    %v1110 = vmul.f32 %v417, %v1088
    %v1111 = vmul.f32 %v418, %v1089
    %v1112 = vmul.f32 %v419, %v1089
    %v1113 = vmul.f32 %v420, %v1090
    %v1114 = vmul.f32 %v421, %v1090
    %v1115 = vsel %vm48, %v1099, 0.0
    %1116 = vadd.xlane.f32.xlu0 %v1115
    %v1117 = vpop.xlane.xlu0 %1116
    %v1118 = vsel %vm48, %v1100, 0.0
    %1119 = vadd.xlane.f32.xlu0 %v1118
    %v1120 = vpop.xlane.xlu0 %1119
    %v1121 = vsel %vm48, %v1101, 0.0
    %1122 = vadd.xlane.f32.xlu0 %v1121
    %v1123 = vpop.xlane.xlu0 %1122
    %v1124 = vsel %vm48, %v1102, 0.0
    %1125 = vadd.xlane.f32.xlu0 %v1124
    %v1126 = vpop.xlane.xlu0 %1125
    %v1127 = vsel %vm48, %v1103, 0.0
    %1128 = vadd.xlane.f32.xlu0 %v1127
    %v1129 = vpop.xlane.xlu0 %1128
    %v1130 = vsel %vm48, %v1104, 0.0
    %1131 = vadd.xlane.f32.xlu0 %v1130
    %v1132 = vpop.xlane.xlu0 %1131
    %v1133 = vsel %vm48, %v1105, 0.0
    %1134 = vadd.xlane.f32.xlu0 %v1133
    %v1135 = vpop.xlane.xlu0 %1134
    %v1136 = vsel %vm48, %v1106, 0.0
    %1137 = vadd.xlane.f32.xlu0 %v1136
    %v1138 = vpop.xlane.xlu0 %1137
    %v1139 = vsel %vm48, %v1107, 0.0
    %1140 = vadd.xlane.f32.xlu0 %v1139
    %v1141 = vpop.xlane.xlu0 %1140
    %v1142 = vsel %vm48, %v1108, 0.0
    %1143 = vadd.xlane.f32.xlu0 %v1142
    %v1144 = vpop.xlane.xlu0 %1143
    %v1145 = vsel %vm48, %v1109, 0.0
    %1146 = vadd.xlane.f32.xlu0 %v1145
    %v1147 = vpop.xlane.xlu0 %1146
    %v1148 = vsel %vm48, %v1110, 0.0
    %1149 = vadd.xlane.f32.xlu0 %v1148
    %v1150 = vpop.xlane.xlu0 %1149
    %v1151 = vsel %vm48, %v1111, 0.0
    %1152 = vadd.xlane.f32.xlu0 %v1151
    %v1153 = vpop.xlane.xlu0 %1152
    %v1154 = vsel %vm48, %v1112, 0.0
    %1155 = vadd.xlane.f32.xlu0 %v1154
    %v1156 = vpop.xlane.xlu0 %1155
    %v1157 = vsel %vm48, %v1113, 0.0
    %1158 = vadd.xlane.f32.xlu0 %v1157
    %v1159 = vpop.xlane.xlu0 %1158
    %v1160 = vsel %vm48, %v1114, 0.0
    %1161 = vadd.xlane.f32.xlu0 %v1160
    %v1162 = vpop.xlane.xlu0 %1161
    %v1163 = vmul.f32 %v1117, %v1117
    %v1164 = vmul.f32 %v1120, %v1120
    %v1165 = vmul.f32 %v1123, %v1123
    %v1166 = vmul.f32 %v1126, %v1126
    %v1167 = vmul.f32 %v1129, %v1129
    %v1168 = vmul.f32 %v1132, %v1132
    %v1169 = vmul.f32 %v1135, %v1135
    %v1170 = vmul.f32 %v1138, %v1138
    %v1171 = vmul.f32 %v1141, %v1141
    %v1172 = vmul.f32 %v1144, %v1144
    %v1173 = vmul.f32 %v1147, %v1147
    %v1174 = vmul.f32 %v1150, %v1150
    %v1175 = vmul.f32 %v1153, %v1153
    %v1176 = vmul.f32 %v1156, %v1156
    %v1177 = vmul.f32 %v1159, %v1159
    %v1178 = vmul.f32 %v1162, %v1162
    %v1195 = vperm.slane %v1163, %v519
    %v1196 = vperm.slane %v1164, %v521
    %v1197 = vsel %vm523, %v1196, %v1195
    %v1198 = vperm.slane %v1165, %v519
    %v1199 = vperm.slane %v1166, %v521
    %v1200 = vsel %vm523, %v1199, %v1198
    %v1201 = vperm.slane %v1167, %v519
    %v1202 = vperm.slane %v1168, %v521
    %v1203 = vsel %vm523, %v1202, %v1201
    %v1204 = vperm.slane %v1169, %v519
    %v1205 = vperm.slane %v1170, %v521
    %v1206 = vsel %vm523, %v1205, %v1204
    %v1207 = vperm.slane %v1171, %v519
    %v1208 = vperm.slane %v1172, %v521
    %v1209 = vsel %vm523, %v1208, %v1207
    %v1210 = vperm.slane %v1173, %v519
    %v1211 = vperm.slane %v1174, %v521
    %v1212 = vsel %vm523, %v1211, %v1210
    %v1213 = vperm.slane %v1175, %v519
    %v1214 = vperm.slane %v1176, %v521
    %v1215 = vsel %vm523, %v1214, %v1213
    %v1216 = vperm.slane %v1177, %v519
    %v1217 = vperm.slane %v1178, %v521
    %v1218 = vsel %vm523, %v1217, %v1216
    %v1219 = vsel %vm546, %v1200, %v1197
    %v1220 = vsel %vm548, %v1203, %v1219
    %v1221 = vsel %vm550, %v1206, %v1220
    %v1222 = vsel %vm546, %v1212, %v1209
    %v1223 = vsel %vm548, %v1215, %v1222
    %v1224 = vsel %vm550, %v1218, %v1223
    %v1227 = vsel %vm557, %v1221, 0.0
    %1228 = vadd.xlane.f32.xlu0 %v1227
    %v1229 = vpop.xlane.xlu0 %1228
    %v1230 = vsel %vm557, %v1224, 0.0
    %1231 = vadd.xlane.f32.xlu0 %v1230
    %v1232 = vpop.xlane.xlu0 %1231
    %v1233 = vrsqrt.pop %v1229
    %v1234 = vmul.f32 %v1233, %v1229
    %v1235 = vmul.f32 %v1234, %v1233
    %v1236 = vmul.f32 0.5, %v1235
    %v1237 = vsub.f32 1.5, %v1236
    %v1238 = vmul.f32 %v1233, %v1237
    %v1239 = vmul.f32 %v1229, %v1238
    %vm1240 = vcmp.eq.f32.partialorder %v1229, inf
    %v1241 = vsel %vm1240, %v1229, %v1239
    %vm1242 = vcmp.eq.f32.partialorder %v1229, 0.0
    %v1243 = vand.u32 %v1229, 2147483648
    %v1244 = vsel %vm1242, %v1243, %v1241
    %v1245 = vrsqrt.pop %v1232
    %v1246 = vmul.f32 %v1245, %v1232
    %v1247 = vmul.f32 %v1246, %v1245
    %v1248 = vmul.f32 0.5, %v1247
    %v1249 = vsub.f32 1.5, %v1248
    %v1250 = vmul.f32 %v1245, %v1249
    %v1251 = vmul.f32 %v1232, %v1250
    %vm1252 = vcmp.eq.f32.partialorder %v1232, inf
    %v1253 = vsel %vm1252, %v1232, %v1251
    %vm1254 = vcmp.eq.f32.partialorder %v1232, 0.0
    %v1255 = vand.u32 %v1232, 2147483648
    %v1256 = vsel %vm1254, %v1255, %v1253
    %v1257 = vadd.f32 %v1229, 1.0
    %v1258 = vadd.f32 %v1232, 1.0
    %v1259 = vrcp.pop %v1257
    %v1260 = vrcp.pop %v1258
    %v1261 = vmul.f32 %v1244, %v1259
    %v1262 = vmul.f32 %v1256, %v1260
    %v1279 = vperm.slane %v1117, %v519
    %v1280 = vperm.slane %v1120, %v521
    %v1281 = vsel %vm523, %v1280, %v1279
    %v1282 = vperm.slane %v1123, %v519
    %v1283 = vperm.slane %v1126, %v521
    %v1284 = vsel %vm523, %v1283, %v1282
    %v1285 = vperm.slane %v1129, %v519
    %v1286 = vperm.slane %v1132, %v521
    %v1287 = vsel %vm523, %v1286, %v1285
    %v1288 = vperm.slane %v1135, %v519
    %v1289 = vperm.slane %v1138, %v521
    %v1290 = vsel %vm523, %v1289, %v1288
    %v1291 = vperm.slane %v1141, %v519
    %v1292 = vperm.slane %v1144, %v521
    %v1293 = vsel %vm523, %v1292, %v1291
    %v1294 = vperm.slane %v1147, %v519
    %v1295 = vperm.slane %v1150, %v521
    %v1296 = vsel %vm523, %v1295, %v1294
    %v1297 = vperm.slane %v1153, %v519
    %v1298 = vperm.slane %v1156, %v521
    %v1299 = vsel %vm523, %v1298, %v1297
    %v1300 = vperm.slane %v1159, %v519
    %v1301 = vperm.slane %v1162, %v521
    %v1302 = vsel %vm523, %v1301, %v1300
    %v1303 = vsel %vm546, %v1284, %v1281
    %v1304 = vsel %vm548, %v1287, %v1303
    %v1305 = vsel %vm550, %v1290, %v1304
    %v1306 = vsel %vm546, %v1296, %v1293
    %v1307 = vsel %vm548, %v1299, %v1306
    %v1308 = vsel %vm550, %v1302, %v1307
    %v1311 = vmul.f32 %v1261, %v1305
    %v1312 = vmul.f32 %v1262, %v1308
    %1313 = vst.msk [vmem:[#allocation7] sm:$0xf] %vm557, %v1311
    %1314 = vst.msk [vmem:[#allocation7 + $0x4] sm:$0xf] %vm557, %v1312
    // Predicated region
    $region18: #{tpu_custom_call.1} parent=1 // pred_check
      _
    $region19: #{tpu_custom_call.1} parent=1 // pred_check_branch
      %1316 = sbr.rel (0) target = $region21
    $region20: #{tpu_custom_call.1} parent=1 // pred_region
      %1318 = vsyncadd [#allocation4], 0
      %s1319 = sshll.u32 [#allocation7], 4
      %s1320 = int_to_ptr.vmem [resolvable:$true] %s1319
      %s1321 = sshll.u32 %s2, 4
      %s1322 = int_to_ptr.hbm [resolvable:$true] %s1321
      %1327 = dma.vmem_to_hbm [thread:$0]  %s1320, 128, %s1322, [#allocation4], 64, 64, 4
    $region21: #{tpu_custom_call.1} parent=1 // pred_fallthru
      _
    // Predicated region
    $region22: #{tpu_custom_call.1} parent=1 // pred_check
      _
    $region23: #{tpu_custom_call.1} parent=1 // pred_check_branch
      %1329 = sbr.rel (0) target = $region25
    $region24: #{tpu_custom_call.1} parent=1 // pred_region
      %1331 = dma.done [#allocation4], 128
    $region25: #{tpu_custom_call.1} parent=1 // pred_fallthru
      _
    %1332 = vsyncpa [#allocation3], 1
    %1333 = vsyncpa [#allocation6], 1
    %1334 = vsyncpa [#allocation4], 1

</llo_original>
